<compile_context>
chip_gen: v6e
topology: v6e:2x2x1
jax: 0.10.0
libtpu: 0.0.40
codegen_flags: <defaults>
</compile_context>

<pallas_src>
import functools

import jax
import jax.numpy as jnp
from jax.experimental import pallas as pl
from jax.experimental.pallas import tpu as pltpu


# --------------------------------- kernel -----------------------------------
def _tcn_kernel(*refs, layer_cfgs, seq_len, inv_scale):
    """Fused TemporalConvNet forward on one (batch_tile * seq_len) lane slab.

    refs layout:
      refs[0]    : x_ref  (C0_pad, N)        N = batch_tile * seq_len (lanes)
      refs[1:-1] : per-layer params, 4 refs per layer:
                     w1s (C_out[+C_out if ds], A*C_in)  stacked conv1 taps
                                                        (+ folded 1x1 downsample
                                                         rows on the shift-0 tap)
                     b1s (C_out[+C_out if ds], 1)
                     w2s (C_out, A*C_out)               stacked conv2 taps
                     b2  (C_out, 1)
      refs[-1]   : o_ref (C_out_last, N)
    layer_cfgs : static tuple of (shifts, has_downsample) per layer, where
                 `shifts` lists the per-tap causal lane shift in the same order
                 the weights were stacked (shift 0 == unshifted tap is last).
    """
    x_ref = refs[0]
    o_ref = refs[-1]
    p_refs = refs[1:-1]

    L = seq_len
    N = x_ref.shape[-1]

    # Position of every lane within its own sequence.  Zeroing taps whose
    # source falls before the sequence start reproduces the causal zero
    # padding and stops taps leaking across the batch elements packed side by
    # side along the lane axis.
    pos = jax.lax.broadcasted_iota(jnp.int32, (1, N), 1) % L

    # Hoisted causal masks: one VPU compare per distinct non-zero shift for
    # the whole kernel (shared by conv1/conv2 and across layers).
    all_shifts = sorted({s for shifts, _ in layer_cfgs for s in shifts if s > 0})
    masks = {s: pos >= s for s in all_shifts}

    def tap(v, s):
        # y[:, t] = v[:, t - s] if (t mod L) >= s else 0           (s static)
        if s == 0:
            return v
        rolled = pltpu.roll(v, shift=s, axis=1)          # XLU lane rotation
        return jnp.where(masks[s], rolled, 0.0)          # wrapped lanes -> 0

    def stack_taps(v, shifts):
        # (A*C, N) stacked activation: one MXU contraction covers all taps.
        cols = [tap(v, s) for s in shifts]
        return cols[0] if len(cols) == 1 else jnp.concatenate(cols, axis=0)

    h = x_ref[...].astype(jnp.float32)                   # (C_layer_in, N)

    idx = 0
    for shifts, has_ds in layer_cfgs:
        w1s_ref, b1s_ref, w2s_ref, b2_ref = p_refs[idx:idx + 4]
        idx += 4
        c_out = w2s_ref.shape[0]

        # conv1: all dilated causal taps in a single matmul + bias.  When the
        # block has a 1x1 downsample, its rows were appended to w1s acting on
        # the shift-0 (last) tap block, so the residual path comes out of the
        # same MXU op.
        # TODO(synk): dropout1/dropout2 are identity (eval-mode semantics).
        comb = jnp.dot(w1s_ref[...], stack_taps(h, shifts),
                       preferred_element_type=jnp.float32) + b1s_ref[...]
        if has_ds:
            h1 = jnp.maximum(comb[:c_out], 0.0)
            res = comb[c_out:]
        else:
            h1 = jnp.maximum(comb, 0.0)
            res = h

        # conv2 (stacked taps) + bias + ReLU — h1 never leaves registers.
        h2 = jnp.maximum(
            jnp.dot(w2s_ref[...], stack_taps(h1, shifts),
                    preferred_element_type=jnp.float32) + b2_ref[...], 0.0)

        h = jnp.maximum(h2 + res, 0.0)                   # block output

    # TemporalConvNet.forward ends with `/ 150`.
    o_ref[...] = (h * inv_scale).astype(o_ref.dtype)


# --------------------------------- wrapper ----------------------------------
def _const_index_map(ndim):
    zeros = (0,) * ndim
    return lambda g: zeros


def _pick_batch_tile(B, L):
    """Lane-tile choice: ~512-1024 lanes/step, >= 2 grid steps when possible."""
    cands = [t for t in range(1, B + 1) if B % t == 0 and (t * L) % 128 == 0]
    if not cands:
        return B                      # single full-slab block (full dims legal)
    in_range = [t for t in cands if 512 <= t * L <= 1024]
    if in_range:
        multi = [t for t in in_range if B // t >= 2]     # keep both v7x TCs busy
        return max(multi) if multi else max(in_range)
    under = [t for t in cands if t * L < 512]
    if under:
        return max(under)             # whole problem is small: fewest steps
    return min(cands)                 # smallest tile above the target range


def temporal_conv_net_forward(x, layer_params, *, kernel_size, batch_tile=None):
    """x: (B, C_in, L) float32 (PyTorch NCL layout). Returns (B, C_out, L)."""
    B, c_in, L = x.shape
    K = kernel_size

    if batch_tile is None:
        batch_tile = _pick_batch_tile(B, L)
    assert B % batch_tile == 0, "batch_tile must divide the batch"
    n_blk = batch_tile * L
    if batch_tile != B:
        assert n_blk % 128 == 0, (
            "batch_tile * seq_len must be a multiple of 128 "
            "(or batch_tile == B for a single full-slab block)")

    # Lane-dense slab: channels on sublanes, batch*seq on the 128-lane axis.
    # Pad the input channels up to a multiple of 8 so the first layer lands on
    # full (8,128) f32 tiles (zero channels x zero weight columns == no-op).
    c0_pad = -(-c_in // 8) * 8
    x_slab = jnp.transpose(x, (1, 0, 2)).reshape(c_in, B * L)
    if c0_pad != c_in:
        x_slab = jnp.pad(x_slab, ((0, c0_pad - c_in), (0, 0)))

    flat_args = [x_slab]
    in_specs = [pl.BlockSpec((c0_pad, n_blk), lambda g: (0, g))]
    layer_cfgs = []
    c_prev, c_prev_pad = c_in, c0_pad
    for i, p in enumerate(layer_params):
        dilation = 2 ** i
        c_out = p["w1"].shape[0]
        has_ds = ("wd" in p) and (p["wd"] is not None)
        assert has_ds == (c_prev != c_out), "downsample iff channel change"

        # Taps whose causal shift reaches past the sequence start everywhere
        # are identically zero -> statically dropped.
        active = [k for k in range(K) if (K - 1 - k) * dilation < L]
        shifts = tuple((K - 1 - k) * dilation for k in active)   # ..., 0 last

        w1 = p["w1"].astype(jnp.float32)                 # (C_out, C_prev, K)
        if c_prev_pad != c_prev:
            w1 = jnp.pad(w1, ((0, 0), (0, c_prev_pad - c_prev), (0, 0)))
        w1s = jnp.concatenate([w1[:, :, k] for k in active], axis=1)
        b1s = p["b1"].reshape(c_out, 1).astype(jnp.float32)
        if has_ds:
            wd = p["wd"][:, :, 0].astype(jnp.float32)    # (C_out, C_prev)
            if c_prev_pad != c_prev:
                wd = jnp.pad(wd, ((0, 0), (0, c_prev_pad - c_prev)))
            # Downsample rows act only on the shift-0 (last) tap block.
            wd_rows = jnp.concatenate(
                [jnp.zeros((c_out, (len(active) - 1) * c_prev_pad), jnp.float32),
                 wd], axis=1)
            w1s = jnp.concatenate([w1s, wd_rows], axis=0)
            b1s = jnp.concatenate(
                [b1s, p["bd"].reshape(c_out, 1).astype(jnp.float32)], axis=0)

        w2 = p["w2"].astype(jnp.float32)                 # (C_out, C_out, K)
        w2s = jnp.concatenate([w2[:, :, k] for k in active], axis=1)
        b2 = p["b2"].reshape(c_out, 1).astype(jnp.float32)

        for a in (w1s, b1s, w2s, b2):
            flat_args.append(a)
            in_specs.append(pl.BlockSpec(a.shape, _const_index_map(a.ndim)))
        layer_cfgs.append((shifts, has_ds))
        c_prev, c_prev_pad = c_out, c_out
    c_last = c_prev

    kernel = functools.partial(
        _tcn_kernel,
        layer_cfgs=tuple(layer_cfgs),
        seq_len=L,
        inv_scale=1.0 / 150.0,
    )

    # TODO(synk): for long sequences, tile the lane axis with a receptive-field
    #             halo (pltpu.emit_pipeline) and set vmem_limit_bytes against
    #             v7x's 64 MiB VMEM; at these shapes the whole slab fits.
    # TODO(synk): bf16 activation/weight storage (f32 accumulation) would halve
    #             HBM/VMEM traffic on v6e/v7x; kept f32 for parity with the
    #             f32 reference (v5e has no bf16 VPU path anyway).
    out_slab = pl.pallas_call(
        kernel,
        out_shape=jax.ShapeDtypeStruct((c_last, B * L), x.dtype),
        grid_spec=pltpu.PrefetchScalarGridSpec(
            num_scalar_prefetch=0,
            grid=(B // batch_tile,),
            in_specs=in_specs,
            out_specs=pl.BlockSpec((c_last, n_blk), lambda g: (0, g)),
        ),
        compiler_params=pltpu.CompilerParams(
            dimension_semantics=("parallel",)),
    )(*flat_args)

    return jnp.transpose(out_slab.reshape(c_last, B, L), (1, 0, 2))


# ----------------------------- pure-JAX reference ----------------------------
def _ref_conv1d(x, w, b, dilation, padding):
    # PyTorch Conv1d semantics (stride=1): symmetric pad, dilated taps.
    B, Ci, L = x.shape
    Co, _, K = w.shape
    xp = jnp.pad(x, ((0, 0), (0, 0), (padding, padding)))
    Lout = L + 2 * padding - dilation * (K - 1)
    out = jnp.zeros((B, Co, Lout), jnp.float32)
    for k in range(K):
        out = out + jnp.einsum(
            "bcl,oc->bol", xp[:, :, k * dilation:k * dilation + Lout], w[:, :, k])
    return out + b[None, :, None]


def _ref_temporal_block(x, p, *, dilation, padding):
    h = _ref_conv1d(x, p["w1"], p["b1"], dilation, padding)[:, :, :-padding]
    h = jax.nn.relu(h)
    h = _ref_conv1d(h, p["w2"], p["b2"], dilation, padding)[:, :, :-padding]
    h = jax.nn.relu(h)
    if "wd" in p and p["wd"] is not None:
        res = jnp.einsum("bcl,oc->bol", x, p["wd"][:, :, 0]) + p["bd"][None, :, None]
    else:
        res = x
    return jax.nn.relu(h + res)


def _ref_tcn(x, layer_params, *, kernel_size):
    h = x
    for i, p in enumerate(layer_params):
        d = 2 ** i
        h = _ref_temporal_block(h, p, dilation=d, padding=(kernel_size - 1) * d)
    return h / 150.0


# ----------------------------- parameter setup -------------------------------
def _weight_norm(v, g):
    # PyTorch weight_norm, dim=0: per-output-channel norm over remaining dims.
    norm = jnp.sqrt(jnp.sum(v * v, axis=(1, 2), keepdims=True))
    return g[:, None, None] * v / norm


def make_tcn_params(key, num_inputs, num_channels, kernel_size):
    params = []
    c_in = num_inputs
    for c_out in num_channels:
        key, k1, k2, k3, k4, k5, k6, k7, k8 = jax.random.split(key, 9)
        v1 = 0.01 * jax.random.normal(k1, (c_out, c_in, kernel_size), jnp.float32)
        g1 = jax.random.uniform(k2, (c_out,), jnp.float32, 0.5, 1.5)
        b1 = 0.1 * jax.random.normal(k3, (c_out,), jnp.float32)
        v2 = 0.01 * jax.random.normal(k4, (c_out, c_out, kernel_size), jnp.float32)
        g2 = jax.random.uniform(k5, (c_out,), jnp.float32, 0.5, 1.5)
        b2 = 0.1 * jax.random.normal(k6, (c_out,), jnp.float32)
        p = dict(w1=_weight_norm(v1, g1), b1=b1,
                 w2=_weight_norm(v2, g2), b2=b2)
        if c_in != c_out:   # PyTorch: downsample only when channels change
            p["wd"] = 0.01 * jax.random.normal(k7, (c_out, c_in, 1), jnp.float32)
            p["bd"] = 0.1 * jax.random.normal(k8, (c_out,), jnp.float32)
        params.append(p)
        c_in = c_out
    return params


if __name__ == "__main__":
    # Small shapes consistent with the module: 5 input channels, three TCN
    # levels of 8 channels (dilations 1, 2, 4), kernel_size=3, batch 8, L=32.
    B, L = 8, 32
    NUM_INPUTS = 5
    NUM_CHANNELS = [8, 8, 8]
    KERNEL_SIZE = 3

    key = jax.random.PRNGKey(0)
    k_x, k_p = jax.random.split(key)
    x = jax.random.normal(k_x, (B, NUM_INPUTS, L), jnp.float32)   # (B, C_in, L)
    params = make_tcn_params(k_p, NUM_INPUTS, NUM_CHANNELS, KERNEL_SIZE)

    ref = _ref_tcn(x, params, kernel_size=KERNEL_SIZE)

    # Auto-picked lane tile (full 256-lane slab at these tiny shapes).
    out = temporal_conv_net_forward(x, params, kernel_size=KERNEL_SIZE)
    out = jax.block_until_ready(out)
    assert out.shape == (B, NUM_CHANNELS[-1], L)
    assert jnp.allclose(out, ref, atol=1e-5, rtol=5e-4), "mismatch (auto tile)"

    # Explicit 128-lane tiles: exercises the multi-step (grid=2) pipeline path.
    out2 = temporal_conv_net_forward(x, params, kernel_size=KERNEL_SIZE,
                                     batch_tile=4)
    out2 = jax.block_until_ready(out2)
    assert jnp.allclose(out2, ref, atol=1e-5, rtol=5e-4), "mismatch (tiled)"

    print("KERNEL_OK")
</pallas_src>

<mosaic_0001>
module attributes {stable_mosaic.version = 11 : i64} {
  func.func @_tcn_kernel(%arg0: i32, %arg1: memref<8x256xf32, #tpu.memory_space<vmem>>, %arg2: memref<16x24xf32, #tpu.memory_space<vmem>>, %arg3: memref<16x1xf32, #tpu.memory_space<vmem>>, %arg4: memref<8x24xf32, #tpu.memory_space<vmem>>, %arg5: memref<8x1xf32, #tpu.memory_space<vmem>>, %arg6: memref<8x24xf32, #tpu.memory_space<vmem>>, %arg7: memref<8x1xf32, #tpu.memory_space<vmem>>, %arg8: memref<8x24xf32, #tpu.memory_space<vmem>>, %arg9: memref<8x1xf32, #tpu.memory_space<vmem>>, %arg10: memref<8x24xf32, #tpu.memory_space<vmem>>, %arg11: memref<8x1xf32, #tpu.memory_space<vmem>>, %arg12: memref<8x24xf32, #tpu.memory_space<vmem>>, %arg13: memref<8x1xf32, #tpu.memory_space<vmem>>, %arg14: memref<8x256xf32, #tpu.memory_space<vmem>>) attributes {dimension_semantics = [#tpu.dimension_semantics<parallel>], iteration_bounds = array<i64: 1>, scalar_prefetch = 0 : i64, scratch_operands = 0 : i64, tpu.core_type = #tpu.core_type<tc>, window_params = [{transform_indices = @transform_0, window_bounds = array<i64: 8, 256>}, {pipeline_mode = #tpu.pipeline_mode<synchronous>, transform_indices = @transform_1, window_bounds = array<i64: 16, 24>}, {pipeline_mode = #tpu.pipeline_mode<synchronous>, transform_indices = @transform_2, window_bounds = array<i64: 16, 1>}, {pipeline_mode = #tpu.pipeline_mode<synchronous>, transform_indices = @transform_3, window_bounds = array<i64: 8, 24>}, {pipeline_mode = #tpu.pipeline_mode<synchronous>, transform_indices = @transform_4, window_bounds = array<i64: 8, 1>}, {pipeline_mode = #tpu.pipeline_mode<synchronous>, transform_indices = @transform_5, window_bounds = array<i64: 8, 24>}, {pipeline_mode = #tpu.pipeline_mode<synchronous>, transform_indices = @transform_6, window_bounds = array<i64: 8, 1>}, {pipeline_mode = #tpu.pipeline_mode<synchronous>, transform_indices = @transform_7, window_bounds = array<i64: 8, 24>}, {pipeline_mode = #tpu.pipeline_mode<synchronous>, transform_indices = @transform_8, window_bounds = array<i64: 8, 1>}, {pipeline_mode = #tpu.pipeline_mode<synchronous>, transform_indices = @transform_9, window_bounds = array<i64: 8, 24>}, {pipeline_mode = #tpu.pipeline_mode<synchronous>, transform_indices = @transform_10, window_bounds = array<i64: 8, 1>}, {pipeline_mode = #tpu.pipeline_mode<synchronous>, transform_indices = @transform_11, window_bounds = array<i64: 8, 24>}, {pipeline_mode = #tpu.pipeline_mode<synchronous>, transform_indices = @transform_12, window_bounds = array<i64: 8, 1>}, {transform_indices = @transform_13, window_bounds = array<i64: 8, 256>}]} {
    %0 = tpu.iota {dimensions = array<i32: 1>} : vector<1x256xi32>
    %c32_i32 = arith.constant 32 : i32
    %c0_i32 = arith.constant 0 : i32
    %1 = arith.cmpi eq, %c32_i32, %c0_i32 : i32
    %c1_i32 = arith.constant 1 : i32
    %2 = arith.select %1, %c1_i32, %c32_i32 : i32
    %3 = vector.broadcast %2 : i32 to vector<1x256xi32>
    %4 = arith.remsi %0, %3 : vector<1x256xi32>
    %c0_i32_0 = arith.constant 0 : i32
    %5 = vector.broadcast %c0_i32_0 : i32 to vector<1x256xi32>
    %6 = arith.cmpi ne, %4, %5 : vector<1x256xi32>
    %c0_i32_1 = arith.constant 0 : i32
    %7 = vector.broadcast %c0_i32_1 : i32 to vector<1x256xi32>
    %8 = arith.cmpi slt, %4, %7 : vector<1x256xi32>
    %c0_i32_2 = arith.constant 0 : i32
    %9 = arith.cmpi slt, %2, %c0_i32_2 : i32
    %10 = vector.broadcast %9 : i1 to vector<1x256xi1>
    %11 = vector.broadcast %10 : vector<1x256xi1> to vector<1x256xi1>
    %12 = arith.xori %8, %11 : vector<1x256xi1>
    %13 = arith.andi %12, %6 : vector<1x256xi1>
    %14 = vector.broadcast %2 : i32 to vector<1x256xi32>
    %15 = arith.addi %4, %14 : vector<1x256xi32>
    %16 = arith.select %13, %15, %4 : vector<1x256xi1>, vector<1x256xi32>
    %c1_i32_3 = arith.constant 1 : i32
    %17 = vector.broadcast %c1_i32_3 : i32 to vector<1x256xi32>
    %18 = arith.cmpi sge, %16, %17 : vector<1x256xi32>
    %c2_i32 = arith.constant 2 : i32
    %19 = vector.broadcast %c2_i32 : i32 to vector<1x256xi32>
    %20 = arith.cmpi sge, %16, %19 : vector<1x256xi32>
    %c4_i32 = arith.constant 4 : i32
    %21 = vector.broadcast %c4_i32 : i32 to vector<1x256xi32>
    %22 = arith.cmpi sge, %16, %21 : vector<1x256xi32>
    %c8_i32 = arith.constant 8 : i32
    %23 = vector.broadcast %c8_i32 : i32 to vector<1x256xi32>
    %24 = arith.cmpi sge, %16, %23 : vector<1x256xi32>
    %c0 = arith.constant 0 : index
    %c0_4 = arith.constant 0 : index
    %25 = vector.load %arg1[%c0, %c0_4] : memref<8x256xf32, #tpu.memory_space<vmem>>, vector<8x256xf32>
    %c0_5 = arith.constant 0 : index
    %c0_6 = arith.constant 0 : index
    %26 = vector.load %arg2[%c0_5, %c0_6] : memref<16x24xf32, #tpu.memory_space<vmem>>, vector<16x24xf32>
    %c2_i32_7 = arith.constant 2 : i32
    %27 = tpu.dynamic_rotate %25 by %c2_i32_7 dim 1 : vector<8x256xf32>, i32 -> vector<8x256xf32>
    %cst = arith.constant 0.000000e+00 : f32
    %28 = vector.shape_cast %20 : vector<1x256xi1> to vector<1x256xi1>
    %29 = vector.broadcast %28 : vector<1x256xi1> to vector<8x256xi1>
    %30 = vector.broadcast %cst : f32 to vector<8x256xf32>
    %31 = arith.select %29, %27, %30 : vector<8x256xi1>, vector<8x256xf32>
    %c1_i32_8 = arith.constant 1 : i32
    %32 = tpu.dynamic_rotate %25 by %c1_i32_8 dim 1 : vector<8x256xf32>, i32 -> vector<8x256xf32>
    %cst_9 = arith.constant 0.000000e+00 : f32
    %33 = vector.shape_cast %18 : vector<1x256xi1> to vector<1x256xi1>
    %34 = vector.broadcast %33 : vector<1x256xi1> to vector<8x256xi1>
    %35 = vector.broadcast %cst_9 : f32 to vector<8x256xf32>
    %36 = arith.select %34, %32, %35 : vector<8x256xi1>, vector<8x256xf32>
    %37 = tpu.concatenate %31, %36, %25 in 0 : vector<8x256xf32>, vector<8x256xf32>, vector<8x256xf32> -> vector<24x256xf32>
    %cst_10 = arith.constant dense<0.000000e+00> : vector<16x256xf32>
    %38 = tpu.matmul %26, %37, %cst_10 {dimension_numbers = #tpu.dot_dimension_numbers<[1], [0], [0], [1], [0, 0, 1, 1], [], []>} : vector<16x24xf32>, vector<24x256xf32>, vector<16x256xf32> -> vector<16x256xf32>
    %c0_11 = arith.constant 0 : index
    %c0_12 = arith.constant 0 : index
    %39 = vector.load %arg3[%c0_11, %c0_12] : memref<16x1xf32, #tpu.memory_space<vmem>>, vector<16x1xf32>
    %40 = vector.broadcast %39 : vector<16x1xf32> to vector<16x256xf32>
    %41 = arith.addf %38, %40 : vector<16x256xf32>
    %42 = vector.extract_strided_slice %41 {offsets = [0, 0], sizes = [8, 256], strides = [1, 1]} : vector<16x256xf32> to vector<8x256xf32>
    %cst_13 = arith.constant 0.000000e+00 : f32
    %43 = vector.broadcast %cst_13 : f32 to vector<8x256xf32>
    %44 = arith.maximumf %42, %43 : vector<8x256xf32>
    %45 = vector.extract_strided_slice %41 {offsets = [8, 0], sizes = [8, 256], strides = [1, 1]} : vector<16x256xf32> to vector<8x256xf32>
    %c0_14 = arith.constant 0 : index
    %c0_15 = arith.constant 0 : index
    %46 = vector.load %arg4[%c0_14, %c0_15] : memref<8x24xf32, #tpu.memory_space<vmem>>, vector<8x24xf32>
    %c2_i32_16 = arith.constant 2 : i32
    %47 = tpu.dynamic_rotate %44 by %c2_i32_16 dim 1 : vector<8x256xf32>, i32 -> vector<8x256xf32>
    %cst_17 = arith.constant 0.000000e+00 : f32
    %48 = vector.shape_cast %20 : vector<1x256xi1> to vector<1x256xi1>
    %49 = vector.broadcast %48 : vector<1x256xi1> to vector<8x256xi1>
    %50 = vector.broadcast %cst_17 : f32 to vector<8x256xf32>
    %51 = arith.select %49, %47, %50 : vector<8x256xi1>, vector<8x256xf32>
    %c1_i32_18 = arith.constant 1 : i32
    %52 = tpu.dynamic_rotate %44 by %c1_i32_18 dim 1 : vector<8x256xf32>, i32 -> vector<8x256xf32>
    %cst_19 = arith.constant 0.000000e+00 : f32
    %53 = vector.shape_cast %18 : vector<1x256xi1> to vector<1x256xi1>
    %54 = vector.broadcast %53 : vector<1x256xi1> to vector<8x256xi1>
    %55 = vector.broadcast %cst_19 : f32 to vector<8x256xf32>
    %56 = arith.select %54, %52, %55 : vector<8x256xi1>, vector<8x256xf32>
    %57 = tpu.concatenate %51, %56, %44 in 0 : vector<8x256xf32>, vector<8x256xf32>, vector<8x256xf32> -> vector<24x256xf32>
    %cst_20 = arith.constant dense<0.000000e+00> : vector<8x256xf32>
    %58 = tpu.matmul %46, %57, %cst_20 {dimension_numbers = #tpu.dot_dimension_numbers<[1], [0], [0], [1], [0, 0, 1, 1], [], []>} : vector<8x24xf32>, vector<24x256xf32>, vector<8x256xf32> -> vector<8x256xf32>
    %c0_21 = arith.constant 0 : index
    %c0_22 = arith.constant 0 : index
    %59 = vector.load %arg5[%c0_21, %c0_22] : memref<8x1xf32, #tpu.memory_space<vmem>>, vector<8x1xf32>
    %60 = vector.broadcast %59 : vector<8x1xf32> to vector<8x256xf32>
    %61 = arith.addf %58, %60 : vector<8x256xf32>
    %cst_23 = arith.constant 0.000000e+00 : f32
    %62 = vector.broadcast %cst_23 : f32 to vector<8x256xf32>
    %63 = arith.maximumf %61, %62 : vector<8x256xf32>
    %64 = arith.addf %63, %45 : vector<8x256xf32>
    %cst_24 = arith.constant 0.000000e+00 : f32
    %65 = vector.broadcast %cst_24 : f32 to vector<8x256xf32>
    %66 = arith.maximumf %64, %65 : vector<8x256xf32>
    %c0_25 = arith.constant 0 : index
    %c0_26 = arith.constant 0 : index
    %67 = vector.load %arg6[%c0_25, %c0_26] : memref<8x24xf32, #tpu.memory_space<vmem>>, vector<8x24xf32>
    %c4_i32_27 = arith.constant 4 : i32
    %68 = tpu.dynamic_rotate %66 by %c4_i32_27 dim 1 : vector<8x256xf32>, i32 -> vector<8x256xf32>
    %cst_28 = arith.constant 0.000000e+00 : f32
    %69 = vector.shape_cast %22 : vector<1x256xi1> to vector<1x256xi1>
    %70 = vector.broadcast %69 : vector<1x256xi1> to vector<8x256xi1>
    %71 = vector.broadcast %cst_28 : f32 to vector<8x256xf32>
    %72 = arith.select %70, %68, %71 : vector<8x256xi1>, vector<8x256xf32>
    %c2_i32_29 = arith.constant 2 : i32
    %73 = tpu.dynamic_rotate %66 by %c2_i32_29 dim 1 : vector<8x256xf32>, i32 -> vector<8x256xf32>
    %cst_30 = arith.constant 0.000000e+00 : f32
    %74 = vector.shape_cast %20 : vector<1x256xi1> to vector<1x256xi1>
    %75 = vector.broadcast %74 : vector<1x256xi1> to vector<8x256xi1>
    %76 = vector.broadcast %cst_30 : f32 to vector<8x256xf32>
    %77 = arith.select %75, %73, %76 : vector<8x256xi1>, vector<8x256xf32>
    %78 = tpu.concatenate %72, %77, %66 in 0 : vector<8x256xf32>, vector<8x256xf32>, vector<8x256xf32> -> vector<24x256xf32>
    %cst_31 = arith.constant dense<0.000000e+00> : vector<8x256xf32>
    %79 = tpu.matmul %67, %78, %cst_31 {dimension_numbers = #tpu.dot_dimension_numbers<[1], [0], [0], [1], [0, 0, 1, 1], [], []>} : vector<8x24xf32>, vector<24x256xf32>, vector<8x256xf32> -> vector<8x256xf32>
    %c0_32 = arith.constant 0 : index
    %c0_33 = arith.constant 0 : index
    %80 = vector.load %arg7[%c0_32, %c0_33] : memref<8x1xf32, #tpu.memory_space<vmem>>, vector<8x1xf32>
    %81 = vector.broadcast %80 : vector<8x1xf32> to vector<8x256xf32>
    %82 = arith.addf %79, %81 : vector<8x256xf32>
    %cst_34 = arith.constant 0.000000e+00 : f32
    %83 = vector.broadcast %cst_34 : f32 to vector<8x256xf32>
    %84 = arith.maximumf %82, %83 : vector<8x256xf32>
    %c0_35 = arith.constant 0 : index
    %c0_36 = arith.constant 0 : index
    %85 = vector.load %arg8[%c0_35, %c0_36] : memref<8x24xf32, #tpu.memory_space<vmem>>, vector<8x24xf32>
    %c4_i32_37 = arith.constant 4 : i32
    %86 = tpu.dynamic_rotate %84 by %c4_i32_37 dim 1 : vector<8x256xf32>, i32 -> vector<8x256xf32>
    %cst_38 = arith.constant 0.000000e+00 : f32
    %87 = vector.shape_cast %22 : vector<1x256xi1> to vector<1x256xi1>
    %88 = vector.broadcast %87 : vector<1x256xi1> to vector<8x256xi1>
    %89 = vector.broadcast %cst_38 : f32 to vector<8x256xf32>
    %90 = arith.select %88, %86, %89 : vector<8x256xi1>, vector<8x256xf32>
    %c2_i32_39 = arith.constant 2 : i32
    %91 = tpu.dynamic_rotate %84 by %c2_i32_39 dim 1 : vector<8x256xf32>, i32 -> vector<8x256xf32>
    %cst_40 = arith.constant 0.000000e+00 : f32
    %92 = vector.shape_cast %20 : vector<1x256xi1> to vector<1x256xi1>
    %93 = vector.broadcast %92 : vector<1x256xi1> to vector<8x256xi1>
    %94 = vector.broadcast %cst_40 : f32 to vector<8x256xf32>
    %95 = arith.select %93, %91, %94 : vector<8x256xi1>, vector<8x256xf32>
    %96 = tpu.concatenate %90, %95, %84 in 0 : vector<8x256xf32>, vector<8x256xf32>, vector<8x256xf32> -> vector<24x256xf32>
    %cst_41 = arith.constant dense<0.000000e+00> : vector<8x256xf32>
    %97 = tpu.matmul %85, %96, %cst_41 {dimension_numbers = #tpu.dot_dimension_numbers<[1], [0], [0], [1], [0, 0, 1, 1], [], []>} : vector<8x24xf32>, vector<24x256xf32>, vector<8x256xf32> -> vector<8x256xf32>
    %c0_42 = arith.constant 0 : index
    %c0_43 = arith.constant 0 : index
    %98 = vector.load %arg9[%c0_42, %c0_43] : memref<8x1xf32, #tpu.memory_space<vmem>>, vector<8x1xf32>
    %99 = vector.broadcast %98 : vector<8x1xf32> to vector<8x256xf32>
    %100 = arith.addf %97, %99 : vector<8x256xf32>
    %cst_44 = arith.constant 0.000000e+00 : f32
    %101 = vector.broadcast %cst_44 : f32 to vector<8x256xf32>
    %102 = arith.maximumf %100, %101 : vector<8x256xf32>
    %103 = arith.addf %102, %66 : vector<8x256xf32>
    %cst_45 = arith.constant 0.000000e+00 : f32
    %104 = vector.broadcast %cst_45 : f32 to vector<8x256xf32>
    %105 = arith.maximumf %103, %104 : vector<8x256xf32>
    %c0_46 = arith.constant 0 : index
    %c0_47 = arith.constant 0 : index
    %106 = vector.load %arg10[%c0_46, %c0_47] : memref<8x24xf32, #tpu.memory_space<vmem>>, vector<8x24xf32>
    %c8_i32_48 = arith.constant 8 : i32
    %107 = tpu.dynamic_rotate %105 by %c8_i32_48 dim 1 : vector<8x256xf32>, i32 -> vector<8x256xf32>
    %cst_49 = arith.constant 0.000000e+00 : f32
    %108 = vector.shape_cast %24 : vector<1x256xi1> to vector<1x256xi1>
    %109 = vector.broadcast %108 : vector<1x256xi1> to vector<8x256xi1>
    %110 = vector.broadcast %cst_49 : f32 to vector<8x256xf32>
    %111 = arith.select %109, %107, %110 : vector<8x256xi1>, vector<8x256xf32>
    %c4_i32_50 = arith.constant 4 : i32
    %112 = tpu.dynamic_rotate %105 by %c4_i32_50 dim 1 : vector<8x256xf32>, i32 -> vector<8x256xf32>
    %cst_51 = arith.constant 0.000000e+00 : f32
    %113 = vector.shape_cast %22 : vector<1x256xi1> to vector<1x256xi1>
    %114 = vector.broadcast %113 : vector<1x256xi1> to vector<8x256xi1>
    %115 = vector.broadcast %cst_51 : f32 to vector<8x256xf32>
    %116 = arith.select %114, %112, %115 : vector<8x256xi1>, vector<8x256xf32>
    %117 = tpu.concatenate %111, %116, %105 in 0 : vector<8x256xf32>, vector<8x256xf32>, vector<8x256xf32> -> vector<24x256xf32>
    %cst_52 = arith.constant dense<0.000000e+00> : vector<8x256xf32>
    %118 = tpu.matmul %106, %117, %cst_52 {dimension_numbers = #tpu.dot_dimension_numbers<[1], [0], [0], [1], [0, 0, 1, 1], [], []>} : vector<8x24xf32>, vector<24x256xf32>, vector<8x256xf32> -> vector<8x256xf32>
    %c0_53 = arith.constant 0 : index
    %c0_54 = arith.constant 0 : index
    %119 = vector.load %arg11[%c0_53, %c0_54] : memref<8x1xf32, #tpu.memory_space<vmem>>, vector<8x1xf32>
    %120 = vector.broadcast %119 : vector<8x1xf32> to vector<8x256xf32>
    %121 = arith.addf %118, %120 : vector<8x256xf32>
    %cst_55 = arith.constant 0.000000e+00 : f32
    %122 = vector.broadcast %cst_55 : f32 to vector<8x256xf32>
    %123 = arith.maximumf %121, %122 : vector<8x256xf32>
    %c0_56 = arith.constant 0 : index
    %c0_57 = arith.constant 0 : index
    %124 = vector.load %arg12[%c0_56, %c0_57] : memref<8x24xf32, #tpu.memory_space<vmem>>, vector<8x24xf32>
    %c8_i32_58 = arith.constant 8 : i32
    %125 = tpu.dynamic_rotate %123 by %c8_i32_58 dim 1 : vector<8x256xf32>, i32 -> vector<8x256xf32>
    %cst_59 = arith.constant 0.000000e+00 : f32
    %126 = vector.shape_cast %24 : vector<1x256xi1> to vector<1x256xi1>
    %127 = vector.broadcast %126 : vector<1x256xi1> to vector<8x256xi1>
    %128 = vector.broadcast %cst_59 : f32 to vector<8x256xf32>
    %129 = arith.select %127, %125, %128 : vector<8x256xi1>, vector<8x256xf32>
    %c4_i32_60 = arith.constant 4 : i32
    %130 = tpu.dynamic_rotate %123 by %c4_i32_60 dim 1 : vector<8x256xf32>, i32 -> vector<8x256xf32>
    %cst_61 = arith.constant 0.000000e+00 : f32
    %131 = vector.shape_cast %22 : vector<1x256xi1> to vector<1x256xi1>
    %132 = vector.broadcast %131 : vector<1x256xi1> to vector<8x256xi1>
    %133 = vector.broadcast %cst_61 : f32 to vector<8x256xf32>
    %134 = arith.select %132, %130, %133 : vector<8x256xi1>, vector<8x256xf32>
    %135 = tpu.concatenate %129, %134, %123 in 0 : vector<8x256xf32>, vector<8x256xf32>, vector<8x256xf32> -> vector<24x256xf32>
    %cst_62 = arith.constant dense<0.000000e+00> : vector<8x256xf32>
    %136 = tpu.matmul %124, %135, %cst_62 {dimension_numbers = #tpu.dot_dimension_numbers<[1], [0], [0], [1], [0, 0, 1, 1], [], []>} : vector<8x24xf32>, vector<24x256xf32>, vector<8x256xf32> -> vector<8x256xf32>
    %c0_63 = arith.constant 0 : index
    %c0_64 = arith.constant 0 : index
    %137 = vector.load %arg13[%c0_63, %c0_64] : memref<8x1xf32, #tpu.memory_space<vmem>>, vector<8x1xf32>
    %138 = vector.broadcast %137 : vector<8x1xf32> to vector<8x256xf32>
    %139 = arith.addf %136, %138 : vector<8x256xf32>
    %cst_65 = arith.constant 0.000000e+00 : f32
    %140 = vector.broadcast %cst_65 : f32 to vector<8x256xf32>
    %141 = arith.maximumf %139, %140 : vector<8x256xf32>
    %142 = arith.addf %141, %105 : vector<8x256xf32>
    %cst_66 = arith.constant 0.000000e+00 : f32
    %143 = vector.broadcast %cst_66 : f32 to vector<8x256xf32>
    %144 = arith.maximumf %142, %143 : vector<8x256xf32>
    %cst_67 = arith.constant 0.00666666683 : f32
    %145 = vector.broadcast %cst_67 : f32 to vector<8x256xf32>
    %146 = arith.mulf %144, %145 : vector<8x256xf32>
    %c0_68 = arith.constant 0 : index
    %c0_69 = arith.constant 0 : index
    %147 = vector.load %arg14[%c0_68, %c0_69] : memref<8x256xf32, #tpu.memory_space<vmem>>, vector<8x256xf32>
    tpu.vector_store %arg14[%c0_68, %c0_69], %146 {strides = array<i32>} : memref<8x256xf32, #tpu.memory_space<vmem>>, vector<8x256xf32>,
    return
  }
  func.func @transform_0(%arg0: i32) -> (i32, i32) {
    %c0_i32 = arith.constant 0 : i32
    %c0_i32_0 = arith.constant 0 : i32
    return %c0_i32, %arg0 : i32, i32
  }
  func.func @transform_1(%arg0: i32) -> (i32, i32) {
    %c0_i32 = arith.constant 0 : i32
    %c0_i32_0 = arith.constant 0 : i32
    %c0_i32_1 = arith.constant 0 : i32
    return %c0_i32, %c0_i32_0 : i32, i32
  }
  func.func @transform_2(%arg0: i32) -> (i32, i32) {
    %c0_i32 = arith.constant 0 : i32
    %c0_i32_0 = arith.constant 0 : i32
    %c0_i32_1 = arith.constant 0 : i32
    return %c0_i32, %c0_i32_0 : i32, i32
  }
  func.func @transform_3(%arg0: i32) -> (i32, i32) {
    %c0_i32 = arith.constant 0 : i32
    %c0_i32_0 = arith.constant 0 : i32
    %c0_i32_1 = arith.constant 0 : i32
    return %c0_i32, %c0_i32_0 : i32, i32
  }
  func.func @transform_4(%arg0: i32) -> (i32, i32) {
    %c0_i32 = arith.constant 0 : i32
    %c0_i32_0 = arith.constant 0 : i32
    %c0_i32_1 = arith.constant 0 : i32
    return %c0_i32, %c0_i32_0 : i32, i32
  }
  func.func @transform_5(%arg0: i32) -> (i32, i32) {
    %c0_i32 = arith.constant 0 : i32
    %c0_i32_0 = arith.constant 0 : i32
    %c0_i32_1 = arith.constant 0 : i32
    return %c0_i32, %c0_i32_0 : i32, i32
  }
  func.func @transform_6(%arg0: i32) -> (i32, i32) {
    %c0_i32 = arith.constant 0 : i32
    %c0_i32_0 = arith.constant 0 : i32
    %c0_i32_1 = arith.constant 0 : i32
    return %c0_i32, %c0_i32_0 : i32, i32
  }
  func.func @transform_7(%arg0: i32) -> (i32, i32) {
    %c0_i32 = arith.constant 0 : i32
    %c0_i32_0 = arith.constant 0 : i32
    %c0_i32_1 = arith.constant 0 : i32
    return %c0_i32, %c0_i32_0 : i32, i32
  }
  func.func @transform_8(%arg0: i32) -> (i32, i32) {
    %c0_i32 = arith.constant 0 : i32
    %c0_i32_0 = arith.constant 0 : i32
    %c0_i32_1 = arith.constant 0 : i32
    return %c0_i32, %c0_i32_0 : i32, i32
  }
  func.func @transform_9(%arg0: i32) -> (i32, i32) {
    %c0_i32 = arith.constant 0 : i32
    %c0_i32_0 = arith.constant 0 : i32
    %c0_i32_1 = arith.constant 0 : i32
    return %c0_i32, %c0_i32_0 : i32, i32
  }
  func.func @transform_10(%arg0: i32) -> (i32, i32) {
    %c0_i32 = arith.constant 0 : i32
    %c0_i32_0 = arith.constant 0 : i32
    %c0_i32_1 = arith.constant 0 : i32
    return %c0_i32, %c0_i32_0 : i32, i32
  }
  func.func @transform_11(%arg0: i32) -> (i32, i32) {
    %c0_i32 = arith.constant 0 : i32
    %c0_i32_0 = arith.constant 0 : i32
    %c0_i32_1 = arith.constant 0 : i32
    return %c0_i32, %c0_i32_0 : i32, i32
  }
  func.func @transform_12(%arg0: i32) -> (i32, i32) {
    %c0_i32 = arith.constant 0 : i32
    %c0_i32_0 = arith.constant 0 : i32
    %c0_i32_1 = arith.constant 0 : i32
    return %c0_i32, %c0_i32_0 : i32, i32
  }
  func.func @transform_13(%arg0: i32) -> (i32, i32) {
    %c0_i32 = arith.constant 0 : i32
    %c0_i32_0 = arith.constant 0 : i32
    return %c0_i32, %arg0 : i32, i32
  }
}

</mosaic_0001>

<llo_original>
// kernel: tpu_custom_call.1
$region0: #{tpu_custom_call.1}
  #allocation0 [shape = 'u32[]', space=smem, size = 0x4, offset = 0x4, fixed_abs, tag = 'smem constant byte address 0x4 - core index']
  #allocation1 [shape = 'u32[144,128]{1,0:T(1,128)}', space=vmem, size = 0x12000, scoped, tag = 'internal scratch']
  %s0 = inlined_call_operand.vmem [shape: f32[8,256], index: 0, kind: input, shape index: {}]
  %s1 = inlined_call_operand.vmem [shape: f32[16,24], index: 1, kind: input, shape index: {}]
  %s2 = inlined_call_operand.vmem [shape: f32[16,1], index: 2, kind: input, shape index: {}]
  %s3 = inlined_call_operand.vmem [shape: f32[8,24], index: 3, kind: input, shape index: {}]
  %s4 = inlined_call_operand.vmem [shape: f32[8,1], index: 4, kind: input, shape index: {}]
  %s5 = inlined_call_operand.vmem [shape: f32[8,24], index: 5, kind: input, shape index: {}]
  %s6 = inlined_call_operand.vmem [shape: f32[8,1], index: 6, kind: input, shape index: {}]
  %s7 = inlined_call_operand.vmem [shape: f32[8,24], index: 7, kind: input, shape index: {}]
  %s8 = inlined_call_operand.vmem [shape: f32[8,1], index: 8, kind: input, shape index: {}]
  %s9 = inlined_call_operand.vmem [shape: f32[8,24], index: 9, kind: input, shape index: {}]
  %s10 = inlined_call_operand.vmem [shape: f32[8,1], index: 10, kind: input, shape index: {}]
  %s11 = inlined_call_operand.vmem [shape: f32[8,24], index: 11, kind: input, shape index: {}]
  %s12 = inlined_call_operand.vmem [shape: f32[8,1], index: 12, kind: input, shape index: {}]
  %s13 = inlined_call_operand.hbm [shape: f32[8,256], index: 13, kind: output, shape index: {}]
  %s14 = sld [smem:[#allocation0]]
  $region62: #{tpu_custom_call.1} parent=0
    _
  %s16 = ssub.s32 1, %s14
  %s17 = scalar_select 0, %s16, %s14
  $region1: #{tpu_custom_call.1} parent=0
    #allocation2 [shape = 'u8[8192]{0}', space=vmem, size = 0x2000, scoped, tag = 'output window, operand 0, single buffered']
    #allocation3 [shape = 's32[1]{0}', space=sflag, size = 0x4, scoped, tag = 'scoped memory for tpu_custom_call.1']
    %18 = vsyncpa [#allocation3], 0
    // Predicated region
    $region2: #{tpu_custom_call.1} parent=1 // pred_check
      _
    $region3: #{tpu_custom_call.1} parent=1 // pred_check_branch
      %20 = sbr.rel (0) target = $region5
    $region4: #{tpu_custom_call.1} parent=1 // pred_region
      _
    $region5: #{tpu_custom_call.1} parent=1 // pred_fallthru
      _
    // Predicated region
    $region6: #{tpu_custom_call.1} parent=1 // pred_check
      _
    $region7: #{tpu_custom_call.1} parent=1 // pred_check_branch
      %22 = sbr.rel (0) target = $region9
    $region8: #{tpu_custom_call.1} parent=1 // pred_region
      _
    $region9: #{tpu_custom_call.1} parent=1 // pred_fallthru
      _
    // Predicated region
    $region10: #{tpu_custom_call.1} parent=1 // pred_check
      _
    $region11: #{tpu_custom_call.1} parent=1 // pred_check_branch
      %24 = sbr.rel (0) target = $region13
    $region12: #{tpu_custom_call.1} parent=1 // pred_region
      _
    $region13: #{tpu_custom_call.1} parent=1 // pred_fallthru
      _
    // Predicated region
    $region14: #{tpu_custom_call.1} parent=1 // pred_check
      _
    $region15: #{tpu_custom_call.1} parent=1 // pred_check_branch
      %26 = sbr.rel (0) target = $region17
    $region16: #{tpu_custom_call.1} parent=1 // pred_region
      _
    $region17: #{tpu_custom_call.1} parent=1 // pred_fallthru
      _
    // Predicated region
    $region18: #{tpu_custom_call.1} parent=1 // pred_check
      _
    $region19: #{tpu_custom_call.1} parent=1 // pred_check_branch
      %28 = sbr.rel (0) target = $region21
    $region20: #{tpu_custom_call.1} parent=1 // pred_region
      _
    $region21: #{tpu_custom_call.1} parent=1 // pred_fallthru
      _
    // Predicated region
    $region22: #{tpu_custom_call.1} parent=1 // pred_check
      _
    $region23: #{tpu_custom_call.1} parent=1 // pred_check_branch
      %30 = sbr.rel (0) target = $region25
    $region24: #{tpu_custom_call.1} parent=1 // pred_region
      _
    $region25: #{tpu_custom_call.1} parent=1 // pred_fallthru
      _
    // Predicated region
    $region26: #{tpu_custom_call.1} parent=1 // pred_check
      _
    $region27: #{tpu_custom_call.1} parent=1 // pred_check_branch
      %32 = sbr.rel (0) target = $region29
    $region28: #{tpu_custom_call.1} parent=1 // pred_region
      _
    $region29: #{tpu_custom_call.1} parent=1 // pred_fallthru
      _
    // Predicated region
    $region30: #{tpu_custom_call.1} parent=1 // pred_check
      _
    $region31: #{tpu_custom_call.1} parent=1 // pred_check_branch
      %34 = sbr.rel (0) target = $region33
    $region32: #{tpu_custom_call.1} parent=1 // pred_region
      _
    $region33: #{tpu_custom_call.1} parent=1 // pred_fallthru
      _
    // Predicated region
    $region34: #{tpu_custom_call.1} parent=1 // pred_check
      _
    $region35: #{tpu_custom_call.1} parent=1 // pred_check_branch
      %36 = sbr.rel (0) target = $region37
    $region36: #{tpu_custom_call.1} parent=1 // pred_region
      _
    $region37: #{tpu_custom_call.1} parent=1 // pred_fallthru
      _
    // Predicated region
    $region38: #{tpu_custom_call.1} parent=1 // pred_check
      _
    $region39: #{tpu_custom_call.1} parent=1 // pred_check_branch
      %38 = sbr.rel (0) target = $region41
    $region40: #{tpu_custom_call.1} parent=1 // pred_region
      _
    $region41: #{tpu_custom_call.1} parent=1 // pred_fallthru
      _
    // Predicated region
    $region42: #{tpu_custom_call.1} parent=1 // pred_check
      _
    $region43: #{tpu_custom_call.1} parent=1 // pred_check_branch
      %40 = sbr.rel (0) target = $region45
    $region44: #{tpu_custom_call.1} parent=1 // pred_region
      _
    $region45: #{tpu_custom_call.1} parent=1 // pred_fallthru
      _
    // Predicated region
    $region46: #{tpu_custom_call.1} parent=1 // pred_check
      _
    $region47: #{tpu_custom_call.1} parent=1 // pred_check_branch
      %42 = sbr.rel (0) target = $region49
    $region48: #{tpu_custom_call.1} parent=1 // pred_region
      _
    $region49: #{tpu_custom_call.1} parent=1 // pred_fallthru
      _
    // Predicated region
    $region50: #{tpu_custom_call.1} parent=1 // pred_check
      _
    $region51: #{tpu_custom_call.1} parent=1 // pred_check_branch
      %44 = sbr.rel (0) target = $region53
    $region52: #{tpu_custom_call.1} parent=1 // pred_region
      _
    $region53: #{tpu_custom_call.1} parent=1 // pred_fallthru
      _
    %v45 = vlaneseq
    %v46 = vand.u32 %v45, 127
    %v47 = vadd.s32 %v46, 128
    %vm48 = vcmp.lt.s32.totalorder %v46, 0
    %v49 = vsub.s32 0, %v46
    %v50 = vsel %vm48, %v49, %v46
    %v51 = vshrl.u32 %v50, 5
    %v52 = vand.u32 %v50, 31
    %v53 = vsub.s32 0, %v52
    %v54 = vsel %vm48, %v53, %v52
    %vm55 = vcmp.lt.s32.totalorder %v47, 0
    %v56 = vsub.s32 0, %v47
    %v57 = vsel %vm55, %v56, %v47
    %v58 = vshrl.u32 %v57, 5
    %v59 = vand.u32 %v57, 31
    %v60 = vsub.s32 0, %v59
    %v61 = vsel %vm55, %v60, %v59
    %vm62 = vcmp.ne.s32.totalorder %v54, 0
    %vm63 = vcmp.ne.s32.totalorder %v61, 0
    %vm64 = vcmp.lt.s32.totalorder %v54, 0
    %vm65 = vcmp.lt.s32.totalorder %v61, 0
    %vm66 = vmand %vm64, %vm62
    %vm67 = vmand %vm65, %vm63
    %v68 = vadd.s32 %v54, 32
    %v69 = vadd.s32 %v61, 32
    %v70 = vsel %vm66, %v68, %v54
    %v71 = vsel %vm67, %v69, %v61
    %vm72 = vcmp.ge.s32.totalorder %v70, 1
    %vm73 = vcmp.ge.s32.totalorder %v71, 1
    %vm74 = vcmp.ge.s32.totalorder %v70, 2
    %vm75 = vcmp.ge.s32.totalorder %v71, 2
    %vm76 = vcmp.ge.s32.totalorder %v70, 4
    %vm77 = vcmp.ge.s32.totalorder %v71, 4
    %vm78 = vcmp.ge.s32.totalorder %v70, 8
    %vm79 = vcmp.ge.s32.totalorder %v71, 8
    %v80 = vld [vmem:[%s0] sm:$0xff]
    %v81 = vld [vmem:[%s0 + $0x8] sm:$0xff]
    %v82 = vld [vmem:[%s1] sm:$0xff]
    %v83 = vld [vmem:[%s1 + $0x8] sm:$0xff]
    %84 = vrot.lane.b32.xlu0 %v80, 2
    %v85 = vpop.permute.xlu0 %84
    %86 = vrot.lane.b32.xlu0 %v81, 2
    %v87 = vpop.permute.xlu0 %86
    %vm88 = vcmp.lt.s32.totalorder %v46, 2
    %v89 = vsel %vm88, %v85, %v87
    %v90 = vsel %vm88, %v87, %v85
    %v91 = vsel %vm74, 1, 0
    %v92 = vsel %vm75, 1, 0
    %vm93 = vcmp.eq.s32.totalorder %v91, 1
    %vm94 = vcmp.eq.s32.totalorder %v92, 1
    %v95 = vsel %vm93, %v90, 0.0
    %v96 = vsel %vm94, %v89, 0.0
    %97 = vrot.lane.b32.xlu0 %v80, 1
    %v98 = vpop.permute.xlu0 %97
    %99 = vrot.lane.b32.xlu0 %v81, 1
    %v100 = vpop.permute.xlu0 %99
    %vm101 = vcmp.lt.s32.totalorder %v46, 1
    %v102 = vsel %vm101, %v98, %v100
    %v103 = vsel %vm101, %v100, %v98
    %v104 = vsel %vm72, 1, 0
    %v105 = vsel %vm73, 1, 0
    %vm106 = vcmp.eq.s32.totalorder %v104, 1
    %vm107 = vcmp.eq.s32.totalorder %v105, 1
    %v108 = vsel %vm106, %v103, 0.0
    %v109 = vsel %vm107, %v102, 0.0
    %v110 = vld [vmem:[%s2] sm:$0xff]
    %v111 = vld [vmem:[%s2 + $0x8] sm:$0xff]
    %113 = vset.pattern.permute.xlu0 0
    %114 = vperm.xlu0 %113, %v110
    %v115 = vpop.permute.xlu0 %114
    %118 = vset.pattern.permute.xlu0 0
    %119 = vperm.xlu0 %118, %v111
    %v120 = vpop.permute.xlu0 %119
    %vm122 = vcmask 195584
    %v124 = vsel %vm122, %v82, 0
    %v127 = vsel %vm122, %v83, 0
    %129 = vmatprep.subr.mxu0 0.0
    %130 = vmatpush1.msra.mxu0 0.0
    %131 = vmatprep.subr.mxu0 0.0
    %132 = vmatpush1.msra.mxu0 0.0
    %133 = vmatprep.subr.mxu0 0.0
    %134 = vmatpush1.msra.mxu0 0.0
    %135 = vmatprep.subr.mxu0 0.0
    %136 = vmatpush1.msra.mxu0 0.0
    %137 = vmatprep.subr.mxu0 0.0
    %138 = vmatpush1.msra.mxu0 0.0
    %139 = vmatprep.subr.mxu0 0.0
    %140 = vmatpush1.msra.mxu0 0.0
    %141 = vmatprep.subr.mxu0 0.0
    %142 = vmatpush1.msra.mxu0 0.0
    %143 = vmatprep.subr.mxu0 0.0
    %144 = vmatpush1.msra.mxu0 0.0
    %145 = vmatprep.subr.mxu0 0.0
    %146 = vmatpush1.msra.mxu0 0.0
    %147 = vmatprep.subr.mxu0 0.0
    %148 = vmatpush1.msra.mxu0 0.0
    %149 = vmatprep.subr.mxu0 0.0
    %150 = vmatpush1.msra.mxu0 0.0
    %151 = vmatprep.subr.mxu0 0.0
    %152 = vmatpush1.msra.mxu0 0.0
    %153 = vmatprep.subr.mxu0 0.0
    %154 = vmatpush1.msra.mxu0 0.0
    %155 = vmatprep.subr.mxu0 %v81
    %156 = vmatpush1.msra.mxu0 %v80
    %157 = vmatprep.subr.mxu0 %v109
    %158 = vmatpush1.msra.mxu0 %v108
    %159 = vmatprep.subr.mxu0 %v96
    %160 = vmatpush1.msra.mxu0 %v95
    %161 = vmatprep.subr.mxu0 0.0
    %162 = vmatpush2.msra.mxu0 0.0
    %163 = vmatprep.subr.mxu0 0.0
    %164 = vmatpush2.msra.mxu0 0.0
    %165 = vmatprep.subr.mxu0 0.0
    %166 = vmatpush2.msra.mxu0 0.0
    %167 = vmatprep.subr.mxu0 0.0
    %168 = vmatpush2.msra.mxu0 0.0
    %169 = vmatprep.subr.mxu0 0.0
    %170 = vmatpush2.msra.mxu0 0.0
    %171 = vmatprep.subr.mxu0 0.0
    %172 = vmatpush2.msra.mxu0 0.0
    %173 = vmatprep.subr.mxu0 0.0
    %174 = vmatpush2.msra.mxu0 0.0
    %175 = vmatprep.subr.mxu0 0.0
    %176 = vmatpush2.msra.mxu0 0.0
    %177 = vmatprep.subr.mxu0 0.0
    %178 = vmatpush2.msra.mxu0 0.0
    %179 = vmatprep.subr.mxu0 0.0
    %180 = vmatpush2.msra.mxu0 0.0
    %181 = vmatprep.subr.mxu0 0.0
    %182 = vmatpush2.msra.mxu0 0.0
    %183 = vmatprep.subr.mxu0 0.0
    %184 = vmatpush2.msra.mxu0 0.0
    %185 = vmatprep.subr.mxu0 0.0
    %186 = vmatpush2.msra.mxu0 0.0
    %187 = vmatprep.subr.mxu0 0.0
    %188 = vmatpush2.msra.mxu0 0.0
    %189 = vmatprep.subr.mxu0 0.0
    %190 = vmatpush2.msra.mxu0 0.0
    %191 = vmatprep.subr.mxu0 0.0
    %192 = vmatpush2.msra.mxu0 0.0
    %193 = vmatprep.mubr.f32.mxu0 0.0
    %194 = vmatmul.mubr.f32.gmra.mxu0 %v124
    %v195 = vpop.f32.mrf.mxu0
    %v196 = vadd.f32 %v115, %v195
    %v197 = vpop.f32.mrf.mxu0
    %v198 = vadd.f32 %v115, %v197
    %199 = vmatprep.mubr.f32.mxu0 0.0
    %200 = vmatmul.mubr.f32.gmra.mxu0 %v127
    %v201 = vpop.f32.mrf.mxu0
    %v202 = vadd.f32 %v120, %v201
    %v203 = vpop.f32.mrf.mxu0
    %v204 = vadd.f32 %v120, %v203
    %205 = vdwg.mxu0
    %v206 = vmax.f32 %v196, 0.0
    %v207 = vmax.f32 %v198, 0.0
    %v208 = vld [vmem:[%s3] sm:$0xff]
    %209 = vrot.lane.b32.xlu0 %v206, 2
    %v210 = vpop.permute.xlu0 %209
    %211 = vrot.lane.b32.xlu0 %v207, 2
    %v212 = vpop.permute.xlu0 %211
    %v213 = vsel %vm88, %v210, %v212
    %v214 = vsel %vm88, %v212, %v210
    %v215 = vsel %vm93, %v214, 0.0
    %v216 = vsel %vm94, %v213, 0.0
    %217 = vrot.lane.b32.xlu0 %v206, 1
    %v218 = vpop.permute.xlu0 %217
    %219 = vrot.lane.b32.xlu0 %v207, 1
    %v220 = vpop.permute.xlu0 %219
    %v221 = vsel %vm101, %v218, %v220
    %v222 = vsel %vm101, %v220, %v218
    %v223 = vsel %vm106, %v222, 0.0
    %v224 = vsel %vm107, %v221, 0.0
    %v225 = vld [vmem:[%s4] sm:$0xff]
    %227 = vset.pattern.permute.xlu0 0
    %228 = vperm.xlu0 %227, %v225
    %v229 = vpop.permute.xlu0 %228
    %v232 = vsel %vm122, %v208, 0
    %234 = vmatprep.subr.mxu0 0.0
    %235 = vmatpush1.msra.mxu0 0.0
    %236 = vmatprep.subr.mxu0 0.0
    %237 = vmatpush1.msra.mxu0 0.0
    %238 = vmatprep.subr.mxu0 0.0
    %239 = vmatpush1.msra.mxu0 0.0
    %240 = vmatprep.subr.mxu0 0.0
    %241 = vmatpush1.msra.mxu0 0.0
    %242 = vmatprep.subr.mxu0 0.0
    %243 = vmatpush1.msra.mxu0 0.0
    %244 = vmatprep.subr.mxu0 0.0
    %245 = vmatpush1.msra.mxu0 0.0
    %246 = vmatprep.subr.mxu0 0.0
    %247 = vmatpush1.msra.mxu0 0.0
    %248 = vmatprep.subr.mxu0 0.0
    %249 = vmatpush1.msra.mxu0 0.0
    %250 = vmatprep.subr.mxu0 0.0
    %251 = vmatpush1.msra.mxu0 0.0
    %252 = vmatprep.subr.mxu0 0.0
    %253 = vmatpush1.msra.mxu0 0.0
    %254 = vmatprep.subr.mxu0 0.0
    %255 = vmatpush1.msra.mxu0 0.0
    %256 = vmatprep.subr.mxu0 0.0
    %257 = vmatpush1.msra.mxu0 0.0
    %258 = vmatprep.subr.mxu0 0.0
    %259 = vmatpush1.msra.mxu0 0.0
    %260 = vmatprep.subr.mxu0 %v207
    %261 = vmatpush1.msra.mxu0 %v206
    %262 = vmatprep.subr.mxu0 %v224
    %263 = vmatpush1.msra.mxu0 %v223
    %264 = vmatprep.subr.mxu0 %v216
    %265 = vmatpush1.msra.mxu0 %v215
    %266 = vmatprep.subr.mxu0 0.0
    %267 = vmatpush2.msra.mxu0 0.0
    %268 = vmatprep.subr.mxu0 0.0
    %269 = vmatpush2.msra.mxu0 0.0
    %270 = vmatprep.subr.mxu0 0.0
    %271 = vmatpush2.msra.mxu0 0.0
    %272 = vmatprep.subr.mxu0 0.0
    %273 = vmatpush2.msra.mxu0 0.0
    %274 = vmatprep.subr.mxu0 0.0
    %275 = vmatpush2.msra.mxu0 0.0
    %276 = vmatprep.subr.mxu0 0.0
    %277 = vmatpush2.msra.mxu0 0.0
    %278 = vmatprep.subr.mxu0 0.0
    %279 = vmatpush2.msra.mxu0 0.0
    %280 = vmatprep.subr.mxu0 0.0
    %281 = vmatpush2.msra.mxu0 0.0
    %282 = vmatprep.subr.mxu0 0.0
    %283 = vmatpush2.msra.mxu0 0.0
    %284 = vmatprep.subr.mxu0 0.0
    %285 = vmatpush2.msra.mxu0 0.0
    %286 = vmatprep.subr.mxu0 0.0
    %287 = vmatpush2.msra.mxu0 0.0
    %288 = vmatprep.subr.mxu0 0.0
    %289 = vmatpush2.msra.mxu0 0.0
    %290 = vmatprep.subr.mxu0 0.0
    %291 = vmatpush2.msra.mxu0 0.0
    %292 = vmatprep.subr.mxu0 0.0
    %293 = vmatpush2.msra.mxu0 0.0
    %294 = vmatprep.subr.mxu0 0.0
    %295 = vmatpush2.msra.mxu0 0.0
    %296 = vmatprep.subr.mxu0 0.0
    %297 = vmatpush2.msra.mxu0 0.0
    %298 = vmatprep.mubr.f32.mxu0 0.0
    %299 = vmatmul.mubr.f32.gmra.mxu0 %v232
    %v300 = vpop.f32.mrf.mxu0
    %v301 = vadd.f32 %v229, %v300
    %v302 = vpop.f32.mrf.mxu0
    %v303 = vadd.f32 %v229, %v302
    %304 = vdwg.mxu0
    %v305 = vmax.f32 %v301, 0.0
    %v306 = vmax.f32 %v303, 0.0
    %v307 = vadd.f32 %v305, %v202
    %v308 = vadd.f32 %v306, %v204
    %v309 = vmax.f32 %v307, 0.0
    %v310 = vmax.f32 %v308, 0.0
    %v311 = vld [vmem:[%s5] sm:$0xff]
    %312 = vrot.lane.b32.xlu0 %v309, 4
    %v313 = vpop.permute.xlu0 %312
    %314 = vrot.lane.b32.xlu0 %v310, 4
    %v315 = vpop.permute.xlu0 %314
    %vm316 = vcmp.lt.s32.totalorder %v46, 4
    %v317 = vsel %vm316, %v313, %v315
    %v318 = vsel %vm316, %v315, %v313
    %v319 = vsel %vm76, 1, 0
    %v320 = vsel %vm77, 1, 0
    %vm321 = vcmp.eq.s32.totalorder %v319, 1
    %vm322 = vcmp.eq.s32.totalorder %v320, 1
    %v323 = vsel %vm321, %v318, 0.0
    %v324 = vsel %vm322, %v317, 0.0
    %325 = vrot.lane.b32.xlu0 %v309, 2
    %v326 = vpop.permute.xlu0 %325
    %327 = vrot.lane.b32.xlu0 %v310, 2
    %v328 = vpop.permute.xlu0 %327
    %v329 = vsel %vm88, %v326, %v328
    %v330 = vsel %vm88, %v328, %v326
    %v331 = vsel %vm93, %v330, 0.0
    %v332 = vsel %vm94, %v329, 0.0
    %v333 = vld [vmem:[%s6] sm:$0xff]
    %335 = vset.pattern.permute.xlu0 0
    %336 = vperm.xlu0 %335, %v333
    %v337 = vpop.permute.xlu0 %336
    %v340 = vsel %vm122, %v311, 0
    %342 = vmatprep.subr.mxu0 0.0
    %343 = vmatpush1.msra.mxu0 0.0
    %344 = vmatprep.subr.mxu0 0.0
    %345 = vmatpush1.msra.mxu0 0.0
    %346 = vmatprep.subr.mxu0 0.0
    %347 = vmatpush1.msra.mxu0 0.0
    %348 = vmatprep.subr.mxu0 0.0
    %349 = vmatpush1.msra.mxu0 0.0
    %350 = vmatprep.subr.mxu0 0.0
    %351 = vmatpush1.msra.mxu0 0.0
    %352 = vmatprep.subr.mxu0 0.0
    %353 = vmatpush1.msra.mxu0 0.0
    %354 = vmatprep.subr.mxu0 0.0
    %355 = vmatpush1.msra.mxu0 0.0
    %356 = vmatprep.subr.mxu0 0.0
    %357 = vmatpush1.msra.mxu0 0.0
    %358 = vmatprep.subr.mxu0 0.0
    %359 = vmatpush1.msra.mxu0 0.0
    %360 = vmatprep.subr.mxu0 0.0
    %361 = vmatpush1.msra.mxu0 0.0
    %362 = vmatprep.subr.mxu0 0.0
    %363 = vmatpush1.msra.mxu0 0.0
    %364 = vmatprep.subr.mxu0 0.0
    %365 = vmatpush1.msra.mxu0 0.0
    %366 = vmatprep.subr.mxu0 0.0
    %367 = vmatpush1.msra.mxu0 0.0
    %368 = vmatprep.subr.mxu0 %v310
    %369 = vmatpush1.msra.mxu0 %v309
    %370 = vmatprep.subr.mxu0 %v332
    %371 = vmatpush1.msra.mxu0 %v331
    %372 = vmatprep.subr.mxu0 %v324
    %373 = vmatpush1.msra.mxu0 %v323
    %374 = vmatprep.subr.mxu0 0.0
    %375 = vmatpush2.msra.mxu0 0.0
    %376 = vmatprep.subr.mxu0 0.0
    %377 = vmatpush2.msra.mxu0 0.0
    %378 = vmatprep.subr.mxu0 0.0
    %379 = vmatpush2.msra.mxu0 0.0
    %380 = vmatprep.subr.mxu0 0.0
    %381 = vmatpush2.msra.mxu0 0.0
    %382 = vmatprep.subr.mxu0 0.0
    %383 = vmatpush2.msra.mxu0 0.0
    %384 = vmatprep.subr.mxu0 0.0
    %385 = vmatpush2.msra.mxu0 0.0
    %386 = vmatprep.subr.mxu0 0.0
    %387 = vmatpush2.msra.mxu0 0.0
    %388 = vmatprep.subr.mxu0 0.0
    %389 = vmatpush2.msra.mxu0 0.0
    %390 = vmatprep.subr.mxu0 0.0
    %391 = vmatpush2.msra.mxu0 0.0
    %392 = vmatprep.subr.mxu0 0.0
    %393 = vmatpush2.msra.mxu0 0.0
    %394 = vmatprep.subr.mxu0 0.0
    %395 = vmatpush2.msra.mxu0 0.0
    %396 = vmatprep.subr.mxu0 0.0
    %397 = vmatpush2.msra.mxu0 0.0
    %398 = vmatprep.subr.mxu0 0.0
    %399 = vmatpush2.msra.mxu0 0.0
    %400 = vmatprep.subr.mxu0 0.0
    %401 = vmatpush2.msra.mxu0 0.0
    %402 = vmatprep.subr.mxu0 0.0
    %403 = vmatpush2.msra.mxu0 0.0
    %404 = vmatprep.subr.mxu0 0.0
    %405 = vmatpush2.msra.mxu0 0.0
    %406 = vmatprep.mubr.f32.mxu0 0.0
    %407 = vmatmul.mubr.f32.gmra.mxu0 %v340
    %v408 = vpop.f32.mrf.mxu0
    %v409 = vadd.f32 %v337, %v408
    %v410 = vpop.f32.mrf.mxu0
    %v411 = vadd.f32 %v337, %v410
    %412 = vdwg.mxu0
    %v413 = vmax.f32 %v409, 0.0
    %v414 = vmax.f32 %v411, 0.0
    %v415 = vld [vmem:[%s7] sm:$0xff]
    %416 = vrot.lane.b32.xlu0 %v413, 4
    %v417 = vpop.permute.xlu0 %416
    %418 = vrot.lane.b32.xlu0 %v414, 4
    %v419 = vpop.permute.xlu0 %418
    %v420 = vsel %vm316, %v417, %v419
    %v421 = vsel %vm316, %v419, %v417
    %v422 = vsel %vm321, %v421, 0.0
    %v423 = vsel %vm322, %v420, 0.0
    %424 = vrot.lane.b32.xlu0 %v413, 2
    %v425 = vpop.permute.xlu0 %424
    %426 = vrot.lane.b32.xlu0 %v414, 2
    %v427 = vpop.permute.xlu0 %426
    %v428 = vsel %vm88, %v425, %v427
    %v429 = vsel %vm88, %v427, %v425
    %v430 = vsel %vm93, %v429, 0.0
    %v431 = vsel %vm94, %v428, 0.0
    %v432 = vld [vmem:[%s8] sm:$0xff]
    %434 = vset.pattern.permute.xlu0 0
    %435 = vperm.xlu0 %434, %v432
    %v436 = vpop.permute.xlu0 %435
    %v439 = vsel %vm122, %v415, 0
    %441 = vmatprep.subr.mxu0 0.0
    %442 = vmatpush1.msra.mxu0 0.0
    %443 = vmatprep.subr.mxu0 0.0
    %444 = vmatpush1.msra.mxu0 0.0
    %445 = vmatprep.subr.mxu0 0.0
    %446 = vmatpush1.msra.mxu0 0.0
    %447 = vmatprep.subr.mxu0 0.0
    %448 = vmatpush1.msra.mxu0 0.0
    %449 = vmatprep.subr.mxu0 0.0
    %450 = vmatpush1.msra.mxu0 0.0
    %451 = vmatprep.subr.mxu0 0.0
    %452 = vmatpush1.msra.mxu0 0.0
    %453 = vmatprep.subr.mxu0 0.0
    %454 = vmatpush1.msra.mxu0 0.0
    %455 = vmatprep.subr.mxu0 0.0
    %456 = vmatpush1.msra.mxu0 0.0
    %457 = vmatprep.subr.mxu0 0.0
    %458 = vmatpush1.msra.mxu0 0.0
    %459 = vmatprep.subr.mxu0 0.0
    %460 = vmatpush1.msra.mxu0 0.0
    %461 = vmatprep.subr.mxu0 0.0
    %462 = vmatpush1.msra.mxu0 0.0
    %463 = vmatprep.subr.mxu0 0.0
    %464 = vmatpush1.msra.mxu0 0.0
    %465 = vmatprep.subr.mxu0 0.0
    %466 = vmatpush1.msra.mxu0 0.0
    %467 = vmatprep.subr.mxu0 %v414
    %468 = vmatpush1.msra.mxu0 %v413
    %469 = vmatprep.subr.mxu0 %v431
    %470 = vmatpush1.msra.mxu0 %v430
    %471 = vmatprep.subr.mxu0 %v423
    %472 = vmatpush1.msra.mxu0 %v422
    %473 = vmatprep.subr.mxu0 0.0
    %474 = vmatpush2.msra.mxu0 0.0
    %475 = vmatprep.subr.mxu0 0.0
    %476 = vmatpush2.msra.mxu0 0.0
    %477 = vmatprep.subr.mxu0 0.0
    %478 = vmatpush2.msra.mxu0 0.0
    %479 = vmatprep.subr.mxu0 0.0
    %480 = vmatpush2.msra.mxu0 0.0
    %481 = vmatprep.subr.mxu0 0.0
    %482 = vmatpush2.msra.mxu0 0.0
    %483 = vmatprep.subr.mxu0 0.0
    %484 = vmatpush2.msra.mxu0 0.0
    %485 = vmatprep.subr.mxu0 0.0
    %486 = vmatpush2.msra.mxu0 0.0
    %487 = vmatprep.subr.mxu0 0.0
    %488 = vmatpush2.msra.mxu0 0.0
    %489 = vmatprep.subr.mxu0 0.0
    %490 = vmatpush2.msra.mxu0 0.0
    %491 = vmatprep.subr.mxu0 0.0
    %492 = vmatpush2.msra.mxu0 0.0
    %493 = vmatprep.subr.mxu0 0.0
    %494 = vmatpush2.msra.mxu0 0.0
    %495 = vmatprep.subr.mxu0 0.0
    %496 = vmatpush2.msra.mxu0 0.0
    %497 = vmatprep.subr.mxu0 0.0
    %498 = vmatpush2.msra.mxu0 0.0
    %499 = vmatprep.subr.mxu0 0.0
    %500 = vmatpush2.msra.mxu0 0.0
    %501 = vmatprep.subr.mxu0 0.0
    %502 = vmatpush2.msra.mxu0 0.0
    %503 = vmatprep.subr.mxu0 0.0
    %504 = vmatpush2.msra.mxu0 0.0
    %505 = vmatprep.mubr.f32.mxu0 0.0
    %506 = vmatmul.mubr.f32.gmra.mxu0 %v439
    %v507 = vpop.f32.mrf.mxu0
    %v508 = vadd.f32 %v436, %v507
    %v509 = vpop.f32.mrf.mxu0
    %v510 = vadd.f32 %v436, %v509
    %511 = vdwg.mxu0
    %v512 = vmax.f32 %v508, 0.0
    %v513 = vmax.f32 %v510, 0.0
    %v514 = vadd.f32 %v512, %v309
    %v515 = vadd.f32 %v513, %v310
    %v516 = vmax.f32 %v514, 0.0
    %v517 = vmax.f32 %v515, 0.0
    %v518 = vld [vmem:[%s9] sm:$0xff]
    %519 = vrot.lane.b32.xlu0 %v516, 8
    %v520 = vpop.permute.xlu0 %519
    %521 = vrot.lane.b32.xlu0 %v517, 8
    %v522 = vpop.permute.xlu0 %521
    %vm523 = vcmp.lt.s32.totalorder %v46, 8
    %v524 = vsel %vm523, %v520, %v522
    %v525 = vsel %vm523, %v522, %v520
    %v526 = vsel %vm78, 1, 0
    %v527 = vsel %vm79, 1, 0
    %vm528 = vcmp.eq.s32.totalorder %v526, 1
    %vm529 = vcmp.eq.s32.totalorder %v527, 1
    %v530 = vsel %vm528, %v525, 0.0
    %v531 = vsel %vm529, %v524, 0.0
    %532 = vrot.lane.b32.xlu0 %v516, 4
    %v533 = vpop.permute.xlu0 %532
    %534 = vrot.lane.b32.xlu0 %v517, 4
    %v535 = vpop.permute.xlu0 %534
    %v536 = vsel %vm316, %v533, %v535
    %v537 = vsel %vm316, %v535, %v533
    %v538 = vsel %vm321, %v537, 0.0
    %v539 = vsel %vm322, %v536, 0.0
    %v540 = vld [vmem:[%s10] sm:$0xff]
    %542 = vset.pattern.permute.xlu0 0
    %543 = vperm.xlu0 %542, %v540
    %v544 = vpop.permute.xlu0 %543
    %v547 = vsel %vm122, %v518, 0
    %549 = vmatprep.subr.mxu0 0.0
    %550 = vmatpush1.msra.mxu0 0.0
    %551 = vmatprep.subr.mxu0 0.0
    %552 = vmatpush1.msra.mxu0 0.0
    %553 = vmatprep.subr.mxu0 0.0
    %554 = vmatpush1.msra.mxu0 0.0
    %555 = vmatprep.subr.mxu0 0.0
    %556 = vmatpush1.msra.mxu0 0.0
    %557 = vmatprep.subr.mxu0 0.0
    %558 = vmatpush1.msra.mxu0 0.0
    %559 = vmatprep.subr.mxu0 0.0
    %560 = vmatpush1.msra.mxu0 0.0
    %561 = vmatprep.subr.mxu0 0.0
    %562 = vmatpush1.msra.mxu0 0.0
    %563 = vmatprep.subr.mxu0 0.0
    %564 = vmatpush1.msra.mxu0 0.0
    %565 = vmatprep.subr.mxu0 0.0
    %566 = vmatpush1.msra.mxu0 0.0
    %567 = vmatprep.subr.mxu0 0.0
    %568 = vmatpush1.msra.mxu0 0.0
    %569 = vmatprep.subr.mxu0 0.0
    %570 = vmatpush1.msra.mxu0 0.0
    %571 = vmatprep.subr.mxu0 0.0
    %572 = vmatpush1.msra.mxu0 0.0
    %573 = vmatprep.subr.mxu0 0.0
    %574 = vmatpush1.msra.mxu0 0.0
    %575 = vmatprep.subr.mxu0 %v517
    %576 = vmatpush1.msra.mxu0 %v516
    %577 = vmatprep.subr.mxu0 %v539
    %578 = vmatpush1.msra.mxu0 %v538
    %579 = vmatprep.subr.mxu0 %v531
    %580 = vmatpush1.msra.mxu0 %v530
    %581 = vmatprep.subr.mxu0 0.0
    %582 = vmatpush2.msra.mxu0 0.0
    %583 = vmatprep.subr.mxu0 0.0
    %584 = vmatpush2.msra.mxu0 0.0
    %585 = vmatprep.subr.mxu0 0.0
    %586 = vmatpush2.msra.mxu0 0.0
    %587 = vmatprep.subr.mxu0 0.0
    %588 = vmatpush2.msra.mxu0 0.0
    %589 = vmatprep.subr.mxu0 0.0
    %590 = vmatpush2.msra.mxu0 0.0
    %591 = vmatprep.subr.mxu0 0.0
    %592 = vmatpush2.msra.mxu0 0.0
    %593 = vmatprep.subr.mxu0 0.0
    %594 = vmatpush2.msra.mxu0 0.0
    %595 = vmatprep.subr.mxu0 0.0
    %596 = vmatpush2.msra.mxu0 0.0
    %597 = vmatprep.subr.mxu0 0.0
    %598 = vmatpush2.msra.mxu0 0.0
    %599 = vmatprep.subr.mxu0 0.0
    %600 = vmatpush2.msra.mxu0 0.0
    %601 = vmatprep.subr.mxu0 0.0
    %602 = vmatpush2.msra.mxu0 0.0
    %603 = vmatprep.subr.mxu0 0.0
    %604 = vmatpush2.msra.mxu0 0.0
    %605 = vmatprep.subr.mxu0 0.0
    %606 = vmatpush2.msra.mxu0 0.0
    %607 = vmatprep.subr.mxu0 0.0
    %608 = vmatpush2.msra.mxu0 0.0
    %609 = vmatprep.subr.mxu0 0.0
    %610 = vmatpush2.msra.mxu0 0.0
    %611 = vmatprep.subr.mxu0 0.0
    %612 = vmatpush2.msra.mxu0 0.0
    %613 = vmatprep.mubr.f32.mxu0 0.0
    %614 = vmatmul.mubr.f32.gmra.mxu0 %v547
    %v615 = vpop.f32.mrf.mxu0
    %v616 = vadd.f32 %v544, %v615
    %v617 = vpop.f32.mrf.mxu0
    %v618 = vadd.f32 %v544, %v617
    %619 = vdwg.mxu0
    %v620 = vmax.f32 %v616, 0.0
    %v621 = vmax.f32 %v618, 0.0
    %v622 = vld [vmem:[%s11] sm:$0xff]
    %623 = vrot.lane.b32.xlu0 %v620, 8
    %v624 = vpop.permute.xlu0 %623
    %625 = vrot.lane.b32.xlu0 %v621, 8
    %v626 = vpop.permute.xlu0 %625
    %v627 = vsel %vm523, %v624, %v626
    %v628 = vsel %vm523, %v626, %v624
    %v629 = vsel %vm528, %v628, 0.0
    %v630 = vsel %vm529, %v627, 0.0
    %631 = vrot.lane.b32.xlu0 %v620, 4
    %v632 = vpop.permute.xlu0 %631
    %633 = vrot.lane.b32.xlu0 %v621, 4
    %v634 = vpop.permute.xlu0 %633
    %v635 = vsel %vm316, %v632, %v634
    %v636 = vsel %vm316, %v634, %v632
    %v637 = vsel %vm321, %v636, 0.0
    %v638 = vsel %vm322, %v635, 0.0
    %v639 = vld [vmem:[%s12] sm:$0xff]
    %641 = vset.pattern.permute.xlu0 0
    %642 = vperm.xlu0 %641, %v639
    %v643 = vpop.permute.xlu0 %642
    %v646 = vsel %vm122, %v622, 0
    %648 = vmatprep.subr.mxu0 0.0
    %649 = vmatpush1.msra.mxu0 0.0
    %650 = vmatprep.subr.mxu0 0.0
    %651 = vmatpush1.msra.mxu0 0.0
    %652 = vmatprep.subr.mxu0 0.0
    %653 = vmatpush1.msra.mxu0 0.0
    %654 = vmatprep.subr.mxu0 0.0
    %655 = vmatpush1.msra.mxu0 0.0
    %656 = vmatprep.subr.mxu0 0.0
    %657 = vmatpush1.msra.mxu0 0.0
    %658 = vmatprep.subr.mxu0 0.0
    %659 = vmatpush1.msra.mxu0 0.0
    %660 = vmatprep.subr.mxu0 0.0
    %661 = vmatpush1.msra.mxu0 0.0
    %662 = vmatprep.subr.mxu0 0.0
    %663 = vmatpush1.msra.mxu0 0.0
    %664 = vmatprep.subr.mxu0 0.0
    %665 = vmatpush1.msra.mxu0 0.0
    %666 = vmatprep.subr.mxu0 0.0
    %667 = vmatpush1.msra.mxu0 0.0
    %668 = vmatprep.subr.mxu0 0.0
    %669 = vmatpush1.msra.mxu0 0.0
    %670 = vmatprep.subr.mxu0 0.0
    %671 = vmatpush1.msra.mxu0 0.0
    %672 = vmatprep.subr.mxu0 0.0
    %673 = vmatpush1.msra.mxu0 0.0
    %674 = vmatprep.subr.mxu0 %v621
    %675 = vmatpush1.msra.mxu0 %v620
    %676 = vmatprep.subr.mxu0 %v638
    %677 = vmatpush1.msra.mxu0 %v637
    %678 = vmatprep.subr.mxu0 %v630
    %679 = vmatpush1.msra.mxu0 %v629
    %680 = vmatprep.subr.mxu0 0.0
    %681 = vmatpush2.msra.mxu0 0.0
    %682 = vmatprep.subr.mxu0 0.0
    %683 = vmatpush2.msra.mxu0 0.0
    %684 = vmatprep.subr.mxu0 0.0
    %685 = vmatpush2.msra.mxu0 0.0
    %686 = vmatprep.subr.mxu0 0.0
    %687 = vmatpush2.msra.mxu0 0.0
    %688 = vmatprep.subr.mxu0 0.0
    %689 = vmatpush2.msra.mxu0 0.0
    %690 = vmatprep.subr.mxu0 0.0
    %691 = vmatpush2.msra.mxu0 0.0
    %692 = vmatprep.subr.mxu0 0.0
    %693 = vmatpush2.msra.mxu0 0.0
    %694 = vmatprep.subr.mxu0 0.0
    %695 = vmatpush2.msra.mxu0 0.0
    %696 = vmatprep.subr.mxu0 0.0
    %697 = vmatpush2.msra.mxu0 0.0
    %698 = vmatprep.subr.mxu0 0.0
    %699 = vmatpush2.msra.mxu0 0.0
    %700 = vmatprep.subr.mxu0 0.0
    %701 = vmatpush2.msra.mxu0 0.0
    %702 = vmatprep.subr.mxu0 0.0
    %703 = vmatpush2.msra.mxu0 0.0
    %704 = vmatprep.subr.mxu0 0.0
    %705 = vmatpush2.msra.mxu0 0.0
    %706 = vmatprep.subr.mxu0 0.0
    %707 = vmatpush2.msra.mxu0 0.0
    %708 = vmatprep.subr.mxu0 0.0
    %709 = vmatpush2.msra.mxu0 0.0
    %710 = vmatprep.subr.mxu0 0.0
    %711 = vmatpush2.msra.mxu0 0.0
    %712 = vmatprep.mubr.f32.mxu0 0.0
    %713 = vmatmul.mubr.f32.gmra.mxu0 %v646
    %v714 = vpop.f32.mrf.mxu0
    %v715 = vadd.f32 %v643, %v714
    %v716 = vpop.f32.mrf.mxu0
    %v717 = vadd.f32 %v643, %v716
    %718 = vdwg.mxu0
    %v719 = vmax.f32 %v715, 0.0
    %v720 = vmax.f32 %v717, 0.0
    %v721 = vadd.f32 %v719, %v516
    %v722 = vadd.f32 %v720, %v517
    %v723 = vmax.f32 %v721, 0.0
    %v724 = vmax.f32 %v722, 0.0
    %v725 = vmul.f32 %v723, 0.006666667
    %v726 = vmul.f32 %v724, 0.006666667
    %727 = vst [vmem:[#allocation2] sm:$0xff] %v725
    %728 = vst [vmem:[#allocation2 + $0x8] sm:$0xff] %v726
    // Predicated region
    $region54: #{tpu_custom_call.1} parent=1 // pred_check
      _
    $region55: #{tpu_custom_call.1} parent=1 // pred_check_branch
      %730 = sbr.rel (0) target = $region57
    $region56: #{tpu_custom_call.1} parent=1 // pred_region
      %s732 = ssub.s32 256, 256
      %733 = vsyncadd [#allocation3], %s732
      %s735 = sshll.u32 [#allocation2], 4
      %s736 = int_to_ptr.vmem [resolvable:$true] %s735
      %738 = dma.vmem_to_hbm [thread:$0]  %s736, 256, %s13, [#allocation3]
    $region57: #{tpu_custom_call.1} parent=1 // pred_fallthru
      _
    // Predicated region
    $region58: #{tpu_custom_call.1} parent=1 // pred_check
      _
    $region59: #{tpu_custom_call.1} parent=1 // pred_check_branch
      %740 = sbr.rel (0) target = $region61
    $region60: #{tpu_custom_call.1} parent=1 // pred_region
      %741 = dma.done [#allocation3], 256
    $region61: #{tpu_custom_call.1} parent=1 // pred_fallthru
      _
    %742 = vsyncpa [#allocation3], 1

</llo_original>
